<compile_context>
chip_gen: v6e
topology: v6e:2x2x1
jax: 0.10.0
libtpu: 0.0.40
codegen_flags: <defaults>
</compile_context>

<pallas_src>
import functools

import jax
import jax.numpy as jnp
from jax.experimental import pallas as pl
from jax.experimental.pallas import tpu as pltpu


def _round_up(x, m):
    return ((x + m - 1) // m) * m


def _cdiv(a, b):
    return -(-a // b)


# ------------------------------ kernels ------------------------------------

def _make_single_shot_kernel(has_bias):
    """One (tm, tn) output tile per grid point; whole-K contraction in one dot."""
    if has_bias:
        def kernel(x_ref, w_ref, b_ref, o_ref):
            acc = jnp.dot(x_ref[...], w_ref[...],
                          preferred_element_type=jnp.float32)
            o_ref[...] = (acc + b_ref[...].astype(jnp.float32)).astype(o_ref.dtype)
    else:
        def kernel(x_ref, w_ref, o_ref):
            o_ref[...] = jnp.dot(
                x_ref[...], w_ref[...], preferred_element_type=jnp.float32
            ).astype(o_ref.dtype)
    return kernel


def _make_ktiled_kernel(has_bias):
    """Fallback for very large K: K grid axis with resident f32 accumulator."""
    if has_bias:
        def kernel(x_ref, w_ref, b_ref, o_ref, acc_ref):
            k = pl.program_id(2)

            @pl.when(k == 0)
            def _():
                acc_ref[...] = jnp.zeros_like(acc_ref)

            acc_ref[...] += jnp.dot(x_ref[...], w_ref[...],
                                    preferred_element_type=jnp.float32)

            @pl.when(k == pl.num_programs(2) - 1)
            def _():
                o_ref[...] = (acc_ref[...] + b_ref[...].astype(jnp.float32)
                              ).astype(o_ref.dtype)
    else:
        def kernel(x_ref, w_ref, o_ref, acc_ref):
            k = pl.program_id(2)

            @pl.when(k == 0)
            def _():
                acc_ref[...] = jnp.zeros_like(acc_ref)

            acc_ref[...] += jnp.dot(x_ref[...], w_ref[...],
                                    preferred_element_type=jnp.float32)

            @pl.when(k == pl.num_programs(2) - 1)
            def _():
                o_ref[...] = acc_ref[...].astype(o_ref.dtype)
    return kernel


# ------------------------------ wrapper -------------------------------------

def _im2col(x_nhwc, KH, KW, SH, SW, PH, PW, DH, DW):
    """XLA-side im2col: (N,H,W,Cin) -> (N*OH*OW, KH*KW*Cin), (kh,kw,cin) order."""
    N, H, W, Cin = x_nhwc.shape
    x_pad = jnp.pad(x_nhwc, ((0, 0), (PH, PH), (PW, PW), (0, 0)))
    Hp, Wp = H + 2 * PH, W + 2 * PW
    OH = (Hp - DH * (KH - 1) - 1) // SH + 1
    OW = (Wp - DW * (KW - 1) - 1) // SW + 1

    taps = []
    for kh in range(KH):
        for kw in range(KW):
            h0, w0 = kh * DH, kw * DW
            patch = jax.lax.slice(
                x_pad,
                (0, h0, w0, 0),
                (N, h0 + (OH - 1) * SH + 1, w0 + (OW - 1) * SW + 1, Cin),
                (1, SH, SW, 1),
            )  # (N, OH, OW, Cin)
            taps.append(patch)
    patches = jnp.stack(taps, axis=3).reshape(N * OH * OW, KH * KW * Cin)
    return patches, OH, OW


def conv2d_concat_forward(x_nchw, weight_cat, *,
                          in_channels, out_channels, kernel_size,
                          stride=1, padding=0, dilation=1, has_bias=True,
                          compute_dtype=None):
    """Forward pass of Conv2dConcat (F.conv2d semantics, groups=1).

    x_nchw:      (N, Cin, H, W)
    weight_cat:  (Cout, Cin*KH*KW + 1) if has_bias else (Cout, Cin*KH*KW)
    returns      (N, Cout, OH, OW)
    """
    KH, KW = (kernel_size, kernel_size) if isinstance(kernel_size, int) else kernel_size
    SH, SW = (stride, stride) if isinstance(stride, int) else stride
    PH, PW = (padding, padding) if isinstance(padding, int) else padding
    DH, DW = (dilation, dilation) if isinstance(dilation, int) else dilation

    N, Cin, H, W = x_nchw.shape
    assert Cin == in_channels
    Cout = out_channels
    out_dtype = x_nchw.dtype
    c_dtype = jnp.dtype(compute_dtype) if compute_dtype is not None else jnp.dtype(out_dtype)
    isz = c_dtype.itemsize
    out_isz = jnp.dtype(out_dtype).itemsize

    # ---- parameter slicing (mirrors _slice_weight / _slice_bias) ----
    if has_bias:
        w_flat = weight_cat[:, :-1]                 # (Cout, Cin*KH*KW)
        bias = weight_cat[:, -1]                    # (Cout,)
    else:
        w_flat = weight_cat
        bias = None
    w_oihw = w_flat.reshape(Cout, Cin, KH, KW)      # PyTorch OIHW
    # HWIO-flattened -> (KH*KW*Cin, Cout), column order (kh, kw, cin)
    w_km = jnp.transpose(w_oihw, (2, 3, 1, 0)).reshape(KH * KW * Cin, Cout)

    # ---- im2col (fold taps into the MXU contraction dim) ----
    x_nhwc = jnp.transpose(x_nchw, (0, 2, 3, 1))
    patches, OH, OW = _im2col(x_nhwc, KH, KW, SH, SW, PH, PW, DH, DW)
    M = N * OH * OW
    K = KH * KW * Cin

    # ---- shape-adaptive tile selection ----
    Kp = _round_up(K, 128)
    cout128 = _round_up(Cout, 128)
    # Cover all of Cout with one lane-dense N tile when modest: im2col operand
    # is then streamed exactly once and weight/bias are DMA'd exactly once.
    tile_n = cout128 if cout128 <= 512 else 256
    Np = _round_up(Cout, tile_n)

    # Large enough to amortize per-step overhead, clamped for tiny outputs,
    # and split >= 2 ways so v7x's two TensorCores both get parallel work.
    tile_m = min(512, max(8, _round_up(_cdiv(M, 2), 8)))
    Mp = _round_up(M, tile_m)

    VMEM_BUDGET = 20 * 1024 * 1024  # stay well inside the 32 MiB scoped limit

    def _single_shot_bytes(tm, tn, kp):
        b = 2 * tm * kp * isz + 2 * kp * tn * isz + 2 * tm * tn * out_isz
        if has_bias:
            b += 2 * tn * 4
        return b

    single_shot = _single_shot_bytes(tile_m, tile_n, Kp) <= VMEM_BUDGET
    if single_shot:
        tile_k = Kp
    else:
        # Fallback for huge K: dtype-adaptive, larger K tile (fewer K steps,
        # fewer accumulator read-modify-write passes).
        tile_k = min(512 if isz <= 2 else 256, Kp)
        Kp = _round_up(K, tile_k)

    # ---- pad operands to tile multiples (lane-dense last dims) ----
    x2d = jnp.pad(patches.astype(c_dtype), ((0, Mp - M), (0, Kp - K)))
    w2d = jnp.pad(w_km.astype(c_dtype), ((0, Kp - K), (0, Np - Cout)))
    operands = [x2d, w2d]
    if has_bias:
        b2d = jnp.pad(bias.astype(jnp.float32).reshape(1, Cout),
                      ((0, 0), (0, Np - Cout)))
        operands.append(b2d)

    mi, nj = Mp // tile_m, Np // tile_n

    if single_shot:
        grid = (mi, nj)
        in_specs = [
            pl.BlockSpec((tile_m, Kp), lambda i, j: (i, 0)),
            pl.BlockSpec((Kp, tile_n), lambda i, j: (0, j)),
        ]
        if has_bias:
            in_specs.append(pl.BlockSpec((1, tile_n), lambda i, j: (0, j)))
        out_specs = pl.BlockSpec((tile_m, tile_n), lambda i, j: (i, j))
        scratch_shapes = []
        kernel = _make_single_shot_kernel(has_bias)
        dim_sem = ("parallel", "parallel")
        x_streams, w_streams = 1, (1 if nj == 1 else mi)
    else:
        grid = (mi, nj, Kp // tile_k)
        in_specs = [
            pl.BlockSpec((tile_m, tile_k), lambda i, j, k: (i, k)),
            pl.BlockSpec((tile_k, tile_n), lambda i, j, k: (k, j)),
        ]
        if has_bias:
            in_specs.append(pl.BlockSpec((1, tile_n), lambda i, j, k: (0, j)))
        out_specs = pl.BlockSpec((tile_m, tile_n), lambda i, j, k: (i, j))
        scratch_shapes = [pltpu.VMEM((tile_m, tile_n), jnp.float32)]
        kernel = _make_ktiled_kernel(has_bias)
        dim_sem = ("parallel", "parallel", "arbitrary")
        x_streams, w_streams = nj, mi

    cost = pl.CostEstimate(
        flops=2 * M * K * Cout,
        transcendentals=0,
        bytes_accessed=int(x2d.size * isz * x_streams
                           + w2d.size * isz * w_streams
                           + (Np * 4 if has_bias else 0)
                           + Mp * Np * out_isz),
    )

    out_p = pl.pallas_call(
        kernel,
        out_shape=jax.ShapeDtypeStruct((Mp, Np), out_dtype),
        grid_spec=pltpu.PrefetchScalarGridSpec(
            num_scalar_prefetch=0,
            grid=grid,
            in_specs=in_specs,
            out_specs=out_specs,
            scratch_shapes=scratch_shapes,
        ),
        compiler_params=pltpu.CompilerParams(
            dimension_semantics=dim_sem,
            vmem_limit_bytes=32 * 1024 * 1024,
        ),
        cost_estimate=cost,
    )(*operands)

    out = out_p[:M, :Cout].reshape(N, OH, OW, Cout)
    return jnp.transpose(out, (0, 3, 1, 2))          # back to NCHW


if __name__ == "__main__":
    # Small deterministic config consistent with the module.
    N, Cin, H, W = 2, 4, 16, 16
    Cout, K = 8, 3
    stride, padding, dilation = 1, 1, 1

    key = jax.random.PRNGKey(0)
    kx, kw, kb = jax.random.split(key, 3)

    x = jax.random.normal(kx, (N, Cin, H, W), jnp.float32)
    # Deterministic concatenated parameter: [flattened conv weight | bias]
    w_flat = jax.random.normal(kw, (Cout, Cin * K * K), jnp.float32) * 0.1
    bias = jax.random.normal(kb, (Cout,), jnp.float32) * 0.1
    weight_cat = jnp.concatenate([w_flat, bias[:, None]], axis=1)  # (Cout, Cin*K*K+1)

    fwd = functools.partial(
        conv2d_concat_forward,
        in_channels=Cin, out_channels=Cout, kernel_size=K,
        stride=stride, padding=padding, dilation=dilation, has_bias=True,
    )
    out = jax.block_until_ready(fwd(x, weight_cat))

    # Pure-JAX reference (F.conv2d semantics) for sanity.
    w_oihw = w_flat.reshape(Cout, Cin, K, K)
    ref = jax.lax.conv_general_dilated(
        x, w_oihw,
        window_strides=(stride, stride),
        padding=((padding, padding), (padding, padding)),
        rhs_dilation=(dilation, dilation),
        dimension_numbers=("NCHW", "OIHW", "NCHW"),
    ) + bias.reshape(1, Cout, 1, 1)

    assert out.shape == ref.shape == (N, Cout, H, W)
    assert jnp.allclose(out, ref, atol=1e-4, rtol=1e-4)
    print("KERNEL_OK")
</pallas_src>

<mosaic_0001>
module attributes {stable_mosaic.version = 11 : i64} {
  func.func @kernel(%arg0: i32, %arg1: i32, %arg2: memref<256x128xf32, #tpu.memory_space<vmem>>, %arg3: memref<128x128xf32, #tpu.memory_space<vmem>>, %arg4: memref<1x128xf32, #tpu.memory_space<vmem>>, %arg5: memref<256x128xf32, #tpu.memory_space<vmem>>) attributes {dimension_semantics = [#tpu.dimension_semantics<parallel>, #tpu.dimension_semantics<parallel>], iteration_bounds = array<i64: 2, 1>, scalar_prefetch = 0 : i64, scratch_operands = 0 : i64, tpu.core_type = #tpu.core_type<tc>, window_params = [{transform_indices = @transform_0, window_bounds = array<i64: 256, 128>}, {transform_indices = @transform_1, window_bounds = array<i64: 128, 128>}, {transform_indices = @transform_2, window_bounds = array<i64: 1, 128>}, {transform_indices = @transform_3, window_bounds = array<i64: 256, 128>}]} {
    %c0 = arith.constant 0 : index
    %c0_0 = arith.constant 0 : index
    %0 = vector.load %arg2[%c0, %c0_0] : memref<256x128xf32, #tpu.memory_space<vmem>>, vector<256x128xf32>
    %c0_1 = arith.constant 0 : index
    %c0_2 = arith.constant 0 : index
    %1 = vector.load %arg3[%c0_1, %c0_2] : memref<128x128xf32, #tpu.memory_space<vmem>>, vector<128x128xf32>
    %cst = arith.constant dense<0.000000e+00> : vector<256x128xf32>
    %2 = tpu.matmul %0, %1, %cst {dimension_numbers = #tpu.dot_dimension_numbers<[1], [0], [0], [1], [0, 0, 1, 1], [], []>} : vector<256x128xf32>, vector<128x128xf32>, vector<256x128xf32> -> vector<256x128xf32>
    %c0_3 = arith.constant 0 : index
    %c0_4 = arith.constant 0 : index
    %3 = vector.load %arg4[%c0_3, %c0_4] : memref<1x128xf32, #tpu.memory_space<vmem>>, vector<1x128xf32>
    %4 = vector.broadcast %3 : vector<1x128xf32> to vector<256x128xf32>
    %5 = arith.addf %2, %4 : vector<256x128xf32>
    %c0_5 = arith.constant 0 : index
    %c0_6 = arith.constant 0 : index
    %6 = vector.load %arg5[%c0_5, %c0_6] : memref<256x128xf32, #tpu.memory_space<vmem>>, vector<256x128xf32>
    tpu.vector_store %arg5[%c0_5, %c0_6], %5 {strides = array<i32>} : memref<256x128xf32, #tpu.memory_space<vmem>>, vector<256x128xf32>,
    return
  }
  func.func @transform_0(%arg0: i32, %arg1: i32) -> (i32, i32) {
    %c0_i32 = arith.constant 0 : i32
    %c0_i32_0 = arith.constant 0 : i32
    return %arg0, %c0_i32 : i32, i32
  }
  func.func @transform_1(%arg0: i32, %arg1: i32) -> (i32, i32) {
    %c0_i32 = arith.constant 0 : i32
    %c0_i32_0 = arith.constant 0 : i32
    return %c0_i32, %arg1 : i32, i32
  }
  func.func @transform_2(%arg0: i32, %arg1: i32) -> (i32, i32) {
    %c0_i32 = arith.constant 0 : i32
    %c0_i32_0 = arith.constant 0 : i32
    return %c0_i32, %arg1 : i32, i32
  }
  func.func @transform_3(%arg0: i32, %arg1: i32) -> (i32, i32) {
    %c0_i32 = arith.constant 0 : i32
    return %arg0, %arg1 : i32, i32
  }
}

</mosaic_0001>

<llo_original>
// kernel: tpu_custom_call.1
$region0: #{tpu_custom_call.1}
  #allocation0 [shape = 'u32[]', space=smem, size = 0x4, offset = 0x4, fixed_abs, tag = 'smem constant byte address 0x4 - core index']
  #allocation1 [shape = 'u32[144,128]{1,0:T(1,128)}', space=vmem, size = 0x12000, scoped, tag = 'internal scratch']
  %s0 = inlined_call_operand.hbm [shape: f32[512,128], index: 0, kind: input, shape index: {}]
  %s1 = inlined_call_operand.hbm [shape: f32[128,128], index: 1, kind: input, shape index: {}]
  %s2 = inlined_call_operand.vmem [shape: f32[1,128], index: 2, kind: input, shape index: {}]
  %s3 = inlined_call_operand.hbm [shape: f32[512,128], index: 3, kind: output, shape index: {}]
  %s4 = sld [smem:[#allocation0]]
  $region53: #{tpu_custom_call.1} parent=0
    _
  %s6 = ssub.s32 1, %s4
  %s7 = scalar_select 0, %s6, %s4
  $region1: #{tpu_custom_call.1} parent=0
    #allocation2 [shape = 'u8[262144]{0}', space=vmem, size = 0x40000, scoped, tag = 'input window, operand 0']
    #allocation3 [shape = 's32[2]{0}', space=sflag, size = 0x8, scoped, tag = 'scoped memory for tpu_custom_call.1']
    #allocation4 [shape = 's32[2]{0}', space=sflag, size = 0x8, scoped, tag = 'scoped memory for tpu_custom_call.1']
    #allocation5 [shape = 'u8[65536]{0}', space=vmem, size = 0x10000, scoped, tag = 'input window, operand 1, single buffered']
    #allocation6 [shape = 's32[1]{0}', space=sflag, size = 0x4, scoped, tag = 'scoped memory for tpu_custom_call.1']
    #allocation7 [shape = 'u8[262144]{0}', space=vmem, size = 0x40000, scoped, tag = 'output window, operand 0']
    %8 = vsyncpa [#allocation3], 0
    %s9 = scalar_lea.sflag [#allocation3], 1
    %10 = vsyncpa %s9, 0
    %11 = vsyncpa [#allocation6], 0
    %12 = vsyncpa [#allocation4], 0
    %s13 = scalar_lea.sflag [#allocation4], 1
    %14 = vsyncpa %s13, 0
    loop: start=0, step=1, limit=4
    $region2: #{tpu_custom_call.1} parent=1 // loop_pre_header
      _
    $region3: #{tpu_custom_call.1} parent=1 // loop_header
      %s16 = sphi 0, %s20
      %p17 = scmp.ge.s32.totalorder %s16, 4
      %s23 = sphi 0, %s35
      %s24 = sphi 0, %s31
      %s25 = sphi 0, %s23
      %s26 = sphi 0, %s24
      %s27 = sphi 0, %s25
      %s28 = sphi 0, %s26
      %s38 = sphi 0, %s40
      %s41 = sphi 0, %s38
      %s42 = sphi 0, %s41
      %s58 = sphi 0, %s42
      %s64 = sphi 0, %s66
      %s67 = sphi 0, %s64
      %s68 = sphi 0, %s67
      %s84 = sphi 0, %s68
      %s90 = sphi 0, %s92
      %s93 = sphi 0, %s90
      %s94 = sphi 0, %s93
      %s110 = sphi 0, %s94
      %s118 = sphi 0, %s120
      %s121 = sphi 0, %s118
      %s122 = sphi 0, %s121
      %s138 = sphi 0, %s122
    $region4: #{tpu_custom_call.1} parent=1 // loop_header_branch
      %19 = sbr.rel (%p17) target = $region8
    $region5: #{tpu_custom_call.1} parent=1 // loop_body
      %s21 = ssub.s32 %s16, 1
      %s22 = ssub.s32 %s16, 2
      %s29 = sadd.s32 1, %s24
      %p30 = scmp.ge.s32.totalorder %s29, 1
      %s31 = scalar_select %p30, 0, %s29
      %s32 = sadd.s32 1, %s23
      %s33 = scalar_select %p30, %s32, %s23
      %p34 = scmp.ge.s32.totalorder %s33, 2
      %s35 = scalar_select %p34, 0, %s33
      %s36 = ssub.s32 %s23, %s35
      %p37 = scmp.eq.s32.totalorder %s36, 0
      %s39 = sadd.s32 %s38, 1
      %s40 = scalar_select %p37, %s38, %s39
      %p43 = pneg %p37
      %p44 = scmp.eq.s32.totalorder %s16, 1
      %p45 = por %p43, %p44
      %p46 = scmp.ne.s32.totalorder %s38, %s41
      %p47 = scmp.eq.s32.totalorder %s16, 0
      %p48 = por %p46, %p47
      %p49 = scmp.ne.s32.totalorder %s38, %s41
      %p50 = scmp.eq.s32.totalorder %s21, 1
      %p51 = por %p49, %p50
      %p52 = scmp.ne.s32.totalorder %s41, %s42
      %p53 = scmp.eq.s32.totalorder %s21, 0
      %p54 = por %p52, %p53
      %p55 = scmp.ne.s32.totalorder %s41, %s42
      %p56 = scmp.eq.s32.totalorder %s22, 1
      %p57 = por %p55, %p56
      %p59 = scmp.ne.s32.totalorder %s42, %s58
      %p60 = scmp.eq.s32.totalorder %s22, 0
      %p61 = por %p59, %p60
      %s62 = ssub.s32 %s24, %s31
      %p63 = scmp.eq.s32.totalorder %s62, 0
      %s65 = sadd.s32 %s64, 1
      %s66 = scalar_select %p63, %s64, %s65
      %p69 = pneg %p63
      %p70 = scmp.eq.s32.totalorder %s16, 1
      %p71 = por %p69, %p70
      %p72 = scmp.ne.s32.totalorder %s64, %s67
      %p73 = scmp.eq.s32.totalorder %s16, 0
      %p74 = por %p72, %p73
      %p75 = scmp.ne.s32.totalorder %s64, %s67
      %p76 = scmp.eq.s32.totalorder %s21, 1
      %p77 = por %p75, %p76
      %p78 = scmp.ne.s32.totalorder %s67, %s68
      %p79 = scmp.eq.s32.totalorder %s21, 0
      %p80 = por %p78, %p79
      %p81 = scmp.ne.s32.totalorder %s67, %s68
      %p82 = scmp.eq.s32.totalorder %s22, 1
      %p83 = por %p81, %p82
      %p85 = scmp.ne.s32.totalorder %s68, %s84
      %p86 = scmp.eq.s32.totalorder %s22, 0
      %p87 = por %p85, %p86
      %s88 = ssub.s32 %s24, %s31
      %p89 = scmp.eq.s32.totalorder %s88, 0
      %s91 = sadd.s32 %s90, 1
      %s92 = scalar_select %p89, %s90, %s91
      %p95 = pneg %p89
      %p96 = scmp.eq.s32.totalorder %s16, 1
      %p97 = por %p95, %p96
      %p98 = scmp.ne.s32.totalorder %s90, %s93
      %p99 = scmp.eq.s32.totalorder %s16, 0
      %p100 = por %p98, %p99
      %p101 = scmp.ne.s32.totalorder %s90, %s93
      %p102 = scmp.eq.s32.totalorder %s21, 1
      %p103 = por %p101, %p102
      %p104 = scmp.ne.s32.totalorder %s93, %s94
      %p105 = scmp.eq.s32.totalorder %s21, 0
      %p106 = por %p104, %p105
      %p107 = scmp.ne.s32.totalorder %s93, %s94
      %p108 = scmp.eq.s32.totalorder %s22, 1
      %p109 = por %p107, %p108
      %p111 = scmp.ne.s32.totalorder %s94, %s110
      %p112 = scmp.eq.s32.totalorder %s22, 0
      %p113 = por %p111, %p112
      %s114 = ssub.s32 %s23, %s35
      %s115 = ssub.s32 %s24, %s31
      %s116 = sor.u32 %s114, %s115
      %p117 = scmp.eq.s32.totalorder %s116, 0
      %s119 = sadd.s32 %s118, 1
      %s120 = scalar_select %p117, %s118, %s119
      %p123 = pneg %p117
      %p124 = scmp.eq.s32.totalorder %s16, 1
      %p125 = por %p123, %p124
      %p126 = scmp.ne.s32.totalorder %s118, %s121
      %p127 = scmp.eq.s32.totalorder %s16, 0
      %p128 = por %p126, %p127
      %p129 = scmp.ne.s32.totalorder %s118, %s121
      %p130 = scmp.eq.s32.totalorder %s21, 1
      %p131 = por %p129, %p130
      %p132 = scmp.ne.s32.totalorder %s121, %s122
      %p133 = scmp.eq.s32.totalorder %s21, 0
      %p134 = por %p132, %p133
      %p135 = scmp.ne.s32.totalorder %s121, %s122
      %p136 = scmp.eq.s32.totalorder %s22, 1
      %p137 = por %p135, %p136
      %p139 = scmp.ne.s32.totalorder %s122, %s138
      %p140 = scmp.eq.s32.totalorder %s22, 0
      %p141 = por %p139, %p140
      %p142 = scmp.le.s32.totalorder 1, %s16
      %p143 = scmp.lt.s32.totalorder %s16, 3
      %p144 = pnand %p142, %p143
      %p145 = pneg %p144
      // Predicated region
      $region9: #{tpu_custom_call.1} parent=5 // pred_check
        _
      $region10: #{tpu_custom_call.1} parent=5 // pred_check_branch
        %147 = sbr.rel (%p144) target = $region12
      $region11: #{tpu_custom_call.1} parent=5 // pred_region
        %s148 = ssub.s32 %s16, 1
        // Predicated region
        $region13: #{tpu_custom_call.1} parent=11 // pred_check
          %p149 = pneg %p80
        $region14: #{tpu_custom_call.1} parent=11 // pred_check_branch
          %151 = sbr.rel (%p149) target = $region16
        $region15: #{tpu_custom_call.1} parent=11 // pred_region
          %s153 = ssub.s32 2048, 2048
          %154 = vsyncadd [#allocation6], %s153
          %s155 = smul.addr %s26, 128
          %s156 = scalar_lea.hbm %s1, %s155
          %s157 = sshll.u32 [#allocation5], 4
          %s158 = int_to_ptr.vmem [resolvable:$true] %s157
          %163 = dma.hbm_to_vmem [thread:$0]  %s156, 2048, %s158, [#allocation6], 128, 128, 8
        $region16: #{tpu_custom_call.1} parent=11 // pred_fallthru
          _
        // Predicated region
        $region17: #{tpu_custom_call.1} parent=11 // pred_check
          %p164 = pneg %p106
        $region18: #{tpu_custom_call.1} parent=11 // pred_check_branch
          %166 = sbr.rel (%p164) target = $region20
        $region19: #{tpu_custom_call.1} parent=11 // pred_region
          %p167 = scmp.lt.s32.totalorder %s26, 0
          %s168 = scalar_select %p167, %s26, 0
          %s169 = scalar_lea.vmem %s2, %s168
        $region20: #{tpu_custom_call.1} parent=11 // pred_fallthru
          _
      $region12: #{tpu_custom_call.1} parent=5 // pred_fallthru
        _
      %p170 = scmp.lt.s32.totalorder %s16, 2
      // Predicated region
      $region21: #{tpu_custom_call.1} parent=5 // pred_check
        %p171 = pneg %p170
      $region22: #{tpu_custom_call.1} parent=5 // pred_check_branch
        %173 = sbr.rel (%p171) target = $region24
      $region23: #{tpu_custom_call.1} parent=5 // pred_region
        // Predicated region
        $region25: #{tpu_custom_call.1} parent=23 // pred_check
          %p174 = pneg %p48
        $region26: #{tpu_custom_call.1} parent=23 // pred_check_branch
          %176 = sbr.rel (%p174) target = $region28
        $region27: #{tpu_custom_call.1} parent=23 // pred_region
          %s177 = sand.u32 %s38, 1
          %s178 = scalar_lea.sflag [#allocation3], %s177
          %s179 = sand.u32 %s38, 1
          %s180 = smul.addr %s179, 256
          %s181 = scalar_lea.vmem [#allocation2], %s180
          %s182 = smul.u32 32, %s23
          %s184 = ssub.s32 4096, 4096
          %185 = vsyncadd %s178, %s184
          %s186 = smul.addr %s182, 128
          %s187 = scalar_lea.hbm %s0, %s186
          %s188 = sshll.u32 %s181, 4
          %s189 = int_to_ptr.vmem [resolvable:$true] %s188
          %194 = dma.hbm_to_vmem [thread:$0]  %s187, 4096, %s189, %s178, 128, 128, 8
        $region28: #{tpu_custom_call.1} parent=23 // pred_fallthru
          _
      $region24: #{tpu_custom_call.1} parent=5 // pred_fallthru
        _
      %p195 = scmp.le.s32.totalorder 1, %s16
      %p196 = scmp.lt.s32.totalorder %s16, 3
      %p197 = pnand %p195, %p196
      %p198 = pneg %p197
      // Predicated region
      $region29: #{tpu_custom_call.1} parent=5 // pred_check
        _
      $region30: #{tpu_custom_call.1} parent=5 // pred_check_branch
        %200 = sbr.rel (%p197) target = $region32
      $region31: #{tpu_custom_call.1} parent=5 // pred_region
        %s201 = ssub.s32 %s16, 1
        %s202 = sand.u32 %s41, 1
        %s203 = scalar_lea.sflag [#allocation3], %s202
        %s204 = sand.u32 %s41, 1
        %s205 = smul.addr %s204, 256
        %s206 = scalar_lea.vmem [#allocation2], %s205
        // Predicated region
        $region33: #{tpu_custom_call.1} parent=31 // pred_check
          %p207 = pneg %p54
        $region34: #{tpu_custom_call.1} parent=31 // pred_check_branch
          %209 = sbr.rel (%p207) target = $region36
        $region35: #{tpu_custom_call.1} parent=31 // pred_region
          %210 = dma.done %s203, 4096
        $region36: #{tpu_custom_call.1} parent=31 // pred_fallthru
          _
        // Predicated region
        $region37: #{tpu_custom_call.1} parent=31 // pred_check
          %p211 = pneg %p80
        $region38: #{tpu_custom_call.1} parent=31 // pred_check_branch
          %213 = sbr.rel (%p211) target = $region40
        $region39: #{tpu_custom_call.1} parent=31 // pred_region
          %214 = dma.done [#allocation6], 2048
        $region40: #{tpu_custom_call.1} parent=31 // pred_fallthru
          _
        %s215 = sand.u32 %s41, 1
        %s216 = scalar_lea.sflag [#allocation3], %s215
        %s217 = sand.u32 %s41, 1
        %s218 = smul.addr %s217, 256
        %s219 = scalar_lea.vmem [#allocation2], %s218
        %p220 = pneg %p54
        %p221 = pneg %p51
        %p222 = pneg %p80
        %p223 = pneg %p77
        %p224 = scmp.lt.s32.totalorder %s26, 0
        %s225 = scalar_select %p224, %s26, 0
        %s226 = scalar_lea.vmem %s2, %s225
        %p227 = pneg %p106
        %p228 = pneg %p103
        %p229 = pneg %p134
        %p230 = pneg %p131
        %s231 = sand.u32 %s121, 1
        %s232 = scalar_lea.sflag [#allocation4], %s231
        %s233 = sand.u32 %s121, 1
        %s234 = smul.addr %s233, 256
        %s235 = scalar_lea.vmem [#allocation7], %s234
        %s236 = smul.u32 32, %s25
        %p237 = scmp.lt.s32.totalorder %s26, 0
        %s238 = scalar_select %p237, %s26, 0
        %s239 = scalar_lea.vmem %s2, %s238
        %s240 = smul.u32 32, %s25
        %v241 = vld [vmem:[%s206] sm:$0xff]
        %v242 = vld [vmem:[%s206 + $0x8] sm:$0xff]
        %v243 = vld [vmem:[%s206 + $0x10] sm:$0xff]
        %v244 = vld [vmem:[%s206 + $0x18] sm:$0xff]
        %v245 = vld [vmem:[%s206 + $0x20] sm:$0xff]
        %v246 = vld [vmem:[%s206 + $0x28] sm:$0xff]
        %v247 = vld [vmem:[%s206 + $0x30] sm:$0xff]
        %v248 = vld [vmem:[%s206 + $0x38] sm:$0xff]
        %v249 = vld [vmem:[%s206 + $0x40] sm:$0xff]
        %v250 = vld [vmem:[%s206 + $0x48] sm:$0xff]
        %v251 = vld [vmem:[%s206 + $0x50] sm:$0xff]
        %v252 = vld [vmem:[%s206 + $0x58] sm:$0xff]
        %v253 = vld [vmem:[%s206 + $0x60] sm:$0xff]
        %v254 = vld [vmem:[%s206 + $0x68] sm:$0xff]
        %v255 = vld [vmem:[%s206 + $0x70] sm:$0xff]
        %v256 = vld [vmem:[%s206 + $0x78] sm:$0xff]
        %v257 = vld [vmem:[%s206 + $0x80] sm:$0xff]
        %v258 = vld [vmem:[%s206 + $0x88] sm:$0xff]
        %v259 = vld [vmem:[%s206 + $0x90] sm:$0xff]
        %v260 = vld [vmem:[%s206 + $0x98] sm:$0xff]
        %v261 = vld [vmem:[%s206 + $0xa0] sm:$0xff]
        %v262 = vld [vmem:[%s206 + $0xa8] sm:$0xff]
        %v263 = vld [vmem:[%s206 + $0xb0] sm:$0xff]
        %v264 = vld [vmem:[%s206 + $0xb8] sm:$0xff]
        %v265 = vld [vmem:[%s206 + $0xc0] sm:$0xff]
        %v266 = vld [vmem:[%s206 + $0xc8] sm:$0xff]
        %v267 = vld [vmem:[%s206 + $0xd0] sm:$0xff]
        %v268 = vld [vmem:[%s206 + $0xd8] sm:$0xff]
        %v269 = vld [vmem:[%s206 + $0xe0] sm:$0xff]
        %v270 = vld [vmem:[%s206 + $0xe8] sm:$0xff]
        %v271 = vld [vmem:[%s206 + $0xf0] sm:$0xff]
        %v272 = vld [vmem:[%s206 + $0xf8] sm:$0xff]
        %v273 = vld [vmem:[#allocation5] sm:$0xff]
        %v274 = vld [vmem:[#allocation5 + $0x8] sm:$0xff]
        %v275 = vld [vmem:[#allocation5 + $0x10] sm:$0xff]
        %v276 = vld [vmem:[#allocation5 + $0x18] sm:$0xff]
        %v277 = vld [vmem:[#allocation5 + $0x20] sm:$0xff]
        %v278 = vld [vmem:[#allocation5 + $0x28] sm:$0xff]
        %v279 = vld [vmem:[#allocation5 + $0x30] sm:$0xff]
        %v280 = vld [vmem:[#allocation5 + $0x38] sm:$0xff]
        %v281 = vld [vmem:[#allocation5 + $0x40] sm:$0xff]
        %v282 = vld [vmem:[#allocation5 + $0x48] sm:$0xff]
        %v283 = vld [vmem:[#allocation5 + $0x50] sm:$0xff]
        %v284 = vld [vmem:[#allocation5 + $0x58] sm:$0xff]
        %v285 = vld [vmem:[#allocation5 + $0x60] sm:$0xff]
        %v286 = vld [vmem:[#allocation5 + $0x68] sm:$0xff]
        %v287 = vld [vmem:[#allocation5 + $0x70] sm:$0xff]
        %v288 = vld [vmem:[#allocation5 + $0x78] sm:$0xff]
        %v289 = vld [vmem:[%s239] sm:$0x1]
        %v291 = vlaneseq
        %v292 = vshrl.u32 %v291, 7
        %v293 = vsub.s32 0, %v292
        %v294 = vrot.slane %v289, %v293
        %296 = vmatprep.subr.mxu0 0.0
        %297 = vmatpush1.msra.mxu0 %v288
        %298 = vmatprep.subr.mxu0 0.0
        %299 = vmatpush1.msra.mxu0 %v287
        %300 = vmatprep.subr.mxu0 0.0
        %301 = vmatpush1.msra.mxu0 %v286
        %302 = vmatprep.subr.mxu0 0.0
        %303 = vmatpush1.msra.mxu0 %v285
        %304 = vmatprep.subr.mxu0 0.0
        %305 = vmatpush1.msra.mxu0 %v284
        %306 = vmatprep.subr.mxu0 0.0
        %307 = vmatpush1.msra.mxu0 %v283
        %308 = vmatprep.subr.mxu0 0.0
        %309 = vmatpush1.msra.mxu0 %v282
        %310 = vmatprep.subr.mxu0 0.0
        %311 = vmatpush1.msra.mxu0 %v281
        %312 = vmatprep.subr.mxu0 0.0
        %313 = vmatpush1.msra.mxu0 %v280
        %314 = vmatprep.subr.mxu0 0.0
        %315 = vmatpush1.msra.mxu0 %v279
        %316 = vmatprep.subr.mxu0 0.0
        %317 = vmatpush1.msra.mxu0 %v278
        %318 = vmatprep.subr.mxu0 0.0
        %319 = vmatpush1.msra.mxu0 %v277
        %320 = vmatprep.subr.mxu0 0.0
        %321 = vmatpush1.msra.mxu0 %v276
        %322 = vmatprep.subr.mxu0 0.0
        %323 = vmatpush1.msra.mxu0 %v275
        %324 = vmatprep.subr.mxu0 0.0
        %325 = vmatpush1.msra.mxu0 %v274
        %326 = vmatprep.subr.mxu0 0.0
        %327 = vmatpush1.msra.mxu0 %v273
        %328 = vmatprep.subr.mxu0 0.0
        %329 = vmatpush2.msra.mxu0 0.0
        %330 = vmatprep.subr.mxu0 0.0
        %331 = vmatpush2.msra.mxu0 0.0
        %332 = vmatprep.subr.mxu0 0.0
        %333 = vmatpush2.msra.mxu0 0.0
        %334 = vmatprep.subr.mxu0 0.0
        %335 = vmatpush2.msra.mxu0 0.0
        %336 = vmatprep.subr.mxu0 0.0
        %337 = vmatpush2.msra.mxu0 0.0
        %338 = vmatprep.subr.mxu0 0.0
        %339 = vmatpush2.msra.mxu0 0.0
        %340 = vmatprep.subr.mxu0 0.0
        %341 = vmatpush2.msra.mxu0 0.0
        %342 = vmatprep.subr.mxu0 0.0
        %343 = vmatpush2.msra.mxu0 0.0
        %344 = vmatprep.subr.mxu0 0.0
        %345 = vmatpush2.msra.mxu0 0.0
        %346 = vmatprep.subr.mxu0 0.0
        %347 = vmatpush2.msra.mxu0 0.0
        %348 = vmatprep.subr.mxu0 0.0
        %349 = vmatpush2.msra.mxu0 0.0
        %350 = vmatprep.subr.mxu0 0.0
        %351 = vmatpush2.msra.mxu0 0.0
        %352 = vmatprep.subr.mxu0 0.0
        %353 = vmatpush2.msra.mxu0 0.0
        %354 = vmatprep.subr.mxu0 0.0
        %355 = vmatpush2.msra.mxu0 0.0
        %356 = vmatprep.subr.mxu0 0.0
        %357 = vmatpush2.msra.mxu0 0.0
        %358 = vmatprep.subr.mxu0 0.0
        %359 = vmatpush2.msra.mxu0 0.0
        %360 = vmatprep.mubr.f32.mxu0 0.0
        %361 = vmatmul.mubr.f32.gmra.mxu0 %v241
        %v362 = vpop.f32.mrf.mxu0
        %v363 = vadd.f32 %v294, %v362
        %v364 = vpop.f32.mrf.mxu0
        %365 = vmatprep.mubr.f32.mxu0 0.0
        %366 = vmatmul.mubr.f32.gmra.mxu0 %v242
        %v367 = vpop.f32.mrf.mxu0
        %v368 = vadd.f32 %v294, %v367
        %v369 = vpop.f32.mrf.mxu0
        %370 = vmatprep.mubr.f32.mxu0 0.0
        %371 = vmatmul.mubr.f32.gmra.mxu0 %v243
        %v372 = vpop.f32.mrf.mxu0
        %v373 = vadd.f32 %v294, %v372
        %v374 = vpop.f32.mrf.mxu0
        %375 = vmatprep.mubr.f32.mxu0 0.0
        %376 = vmatmul.mubr.f32.gmra.mxu0 %v244
        %v377 = vpop.f32.mrf.mxu0
        %v378 = vadd.f32 %v294, %v377
        %v379 = vpop.f32.mrf.mxu0
        %380 = vmatprep.mubr.f32.mxu0 0.0
        %381 = vmatmul.mubr.f32.gmra.mxu0 %v245
        %v382 = vpop.f32.mrf.mxu0
        %v383 = vadd.f32 %v294, %v382
        %v384 = vpop.f32.mrf.mxu0
        %385 = vmatprep.mubr.f32.mxu0 0.0
        %386 = vmatmul.mubr.f32.gmra.mxu0 %v246
        %v387 = vpop.f32.mrf.mxu0
        %v388 = vadd.f32 %v294, %v387
        %v389 = vpop.f32.mrf.mxu0
        %390 = vmatprep.mubr.f32.mxu0 0.0
        %391 = vmatmul.mubr.f32.gmra.mxu0 %v247
        %v392 = vpop.f32.mrf.mxu0
        %v393 = vadd.f32 %v294, %v392
        %v394 = vpop.f32.mrf.mxu0
        %395 = vmatprep.mubr.f32.mxu0 0.0
        %396 = vmatmul.mubr.f32.gmra.mxu0 %v248
        %v397 = vpop.f32.mrf.mxu0
        %v398 = vadd.f32 %v294, %v397
        %v399 = vpop.f32.mrf.mxu0
        %400 = vmatprep.mubr.f32.mxu0 0.0
        %401 = vmatmul.mubr.f32.gmra.mxu0 %v249
        %v402 = vpop.f32.mrf.mxu0
        %v403 = vadd.f32 %v294, %v402
        %v404 = vpop.f32.mrf.mxu0
        %405 = vmatprep.mubr.f32.mxu0 0.0
        %406 = vmatmul.mubr.f32.gmra.mxu0 %v250
        %v407 = vpop.f32.mrf.mxu0
        %v408 = vadd.f32 %v294, %v407
        %v409 = vpop.f32.mrf.mxu0
        %410 = vmatprep.mubr.f32.mxu0 0.0
        %411 = vmatmul.mubr.f32.gmra.mxu0 %v251
        %v412 = vpop.f32.mrf.mxu0
        %v413 = vadd.f32 %v294, %v412
        %v414 = vpop.f32.mrf.mxu0
        %415 = vmatprep.mubr.f32.mxu0 0.0
        %416 = vmatmul.mubr.f32.gmra.mxu0 %v252
        %v417 = vpop.f32.mrf.mxu0
        %v418 = vadd.f32 %v294, %v417
        %v419 = vpop.f32.mrf.mxu0
        %420 = vmatprep.mubr.f32.mxu0 0.0
        %421 = vmatmul.mubr.f32.gmra.mxu0 %v253
        %v422 = vpop.f32.mrf.mxu0
        %v423 = vadd.f32 %v294, %v422
        %v424 = vpop.f32.mrf.mxu0
        %425 = vmatprep.mubr.f32.mxu0 0.0
        %426 = vmatmul.mubr.f32.gmra.mxu0 %v254
        %v427 = vpop.f32.mrf.mxu0
        %v428 = vadd.f32 %v294, %v427
        %v429 = vpop.f32.mrf.mxu0
        %430 = vmatprep.mubr.f32.mxu0 0.0
        %431 = vmatmul.mubr.f32.gmra.mxu0 %v255
        %v432 = vpop.f32.mrf.mxu0
        %v433 = vadd.f32 %v294, %v432
        %v434 = vpop.f32.mrf.mxu0
        %435 = vmatprep.mubr.f32.mxu0 0.0
        %436 = vmatmul.mubr.f32.gmra.mxu0 %v256
        %v437 = vpop.f32.mrf.mxu0
        %v438 = vadd.f32 %v294, %v437
        %v439 = vpop.f32.mrf.mxu0
        %440 = vmatprep.mubr.f32.mxu0 0.0
        %441 = vmatmul.mubr.f32.gmra.mxu0 %v257
        %v442 = vpop.f32.mrf.mxu0
        %v443 = vadd.f32 %v294, %v442
        %v444 = vpop.f32.mrf.mxu0
        %445 = vmatprep.mubr.f32.mxu0 0.0
        %446 = vmatmul.mubr.f32.gmra.mxu0 %v258
        %v447 = vpop.f32.mrf.mxu0
        %v448 = vadd.f32 %v294, %v447
        %v449 = vpop.f32.mrf.mxu0
        %450 = vmatprep.mubr.f32.mxu0 0.0
        %451 = vmatmul.mubr.f32.gmra.mxu0 %v259
        %v452 = vpop.f32.mrf.mxu0
        %v453 = vadd.f32 %v294, %v452
        %v454 = vpop.f32.mrf.mxu0
        %455 = vmatprep.mubr.f32.mxu0 0.0
        %456 = vmatmul.mubr.f32.gmra.mxu0 %v260
        %v457 = vpop.f32.mrf.mxu0
        %v458 = vadd.f32 %v294, %v457
        %v459 = vpop.f32.mrf.mxu0
        %460 = vmatprep.mubr.f32.mxu0 0.0
        %461 = vmatmul.mubr.f32.gmra.mxu0 %v261
        %v462 = vpop.f32.mrf.mxu0
        %v463 = vadd.f32 %v294, %v462
        %v464 = vpop.f32.mrf.mxu0
        %465 = vmatprep.mubr.f32.mxu0 0.0
        %466 = vmatmul.mubr.f32.gmra.mxu0 %v262
        %v467 = vpop.f32.mrf.mxu0
        %v468 = vadd.f32 %v294, %v467
        %v469 = vpop.f32.mrf.mxu0
        %470 = vmatprep.mubr.f32.mxu0 0.0
        %471 = vmatmul.mubr.f32.gmra.mxu0 %v263
        %v472 = vpop.f32.mrf.mxu0
        %v473 = vadd.f32 %v294, %v472
        %v474 = vpop.f32.mrf.mxu0
        %475 = vmatprep.mubr.f32.mxu0 0.0
        %476 = vmatmul.mubr.f32.gmra.mxu0 %v264
        %v477 = vpop.f32.mrf.mxu0
        %v478 = vadd.f32 %v294, %v477
        %v479 = vpop.f32.mrf.mxu0
        %480 = vmatprep.mubr.f32.mxu0 0.0
        %481 = vmatmul.mubr.f32.gmra.mxu0 %v265
        %v482 = vpop.f32.mrf.mxu0
        %v483 = vadd.f32 %v294, %v482
        %v484 = vpop.f32.mrf.mxu0
        %485 = vmatprep.mubr.f32.mxu0 0.0
        %486 = vmatmul.mubr.f32.gmra.mxu0 %v266
        %v487 = vpop.f32.mrf.mxu0
        %v488 = vadd.f32 %v294, %v487
        %v489 = vpop.f32.mrf.mxu0
        %490 = vmatprep.mubr.f32.mxu0 0.0
        %491 = vmatmul.mubr.f32.gmra.mxu0 %v267
        %v492 = vpop.f32.mrf.mxu0
        %v493 = vadd.f32 %v294, %v492
        %v494 = vpop.f32.mrf.mxu0
        %495 = vmatprep.mubr.f32.mxu0 0.0
        %496 = vmatmul.mubr.f32.gmra.mxu0 %v268
        %v497 = vpop.f32.mrf.mxu0
        %v498 = vadd.f32 %v294, %v497
        %v499 = vpop.f32.mrf.mxu0
        %500 = vmatprep.mubr.f32.mxu0 0.0
        %501 = vmatmul.mubr.f32.gmra.mxu0 %v269
        %v502 = vpop.f32.mrf.mxu0
        %v503 = vadd.f32 %v294, %v502
        %v504 = vpop.f32.mrf.mxu0
        %505 = vmatprep.mubr.f32.mxu0 0.0
        %506 = vmatmul.mubr.f32.gmra.mxu0 %v270
        %v507 = vpop.f32.mrf.mxu0
        %v508 = vadd.f32 %v294, %v507
        %v509 = vpop.f32.mrf.mxu0
        %510 = vmatprep.mubr.f32.mxu0 0.0
        %511 = vmatmul.mubr.f32.gmra.mxu0 %v271
        %v512 = vpop.f32.mrf.mxu0
        %v513 = vadd.f32 %v294, %v512
        %v514 = vpop.f32.mrf.mxu0
        %515 = vmatprep.mubr.f32.mxu0 0.0
        %516 = vmatmul.mubr.f32.gmra.mxu0 %v272
        %v517 = vpop.f32.mrf.mxu0
        %v518 = vadd.f32 %v294, %v517
        %v519 = vpop.f32.mrf.mxu0
        %520 = vdwg.mxu0
        %521 = vst [vmem:[%s235] sm:$0xff] %v363
        %522 = vst [vmem:[%s235 + $0x8] sm:$0xff] %v368
        %523 = vst [vmem:[%s235 + $0x10] sm:$0xff] %v373
        %524 = vst [vmem:[%s235 + $0x18] sm:$0xff] %v378
        %525 = vst [vmem:[%s235 + $0x20] sm:$0xff] %v383
        %526 = vst [vmem:[%s235 + $0x28] sm:$0xff] %v388
        %527 = vst [vmem:[%s235 + $0x30] sm:$0xff] %v393
        %528 = vst [vmem:[%s235 + $0x38] sm:$0xff] %v398
        %529 = vst [vmem:[%s235 + $0x40] sm:$0xff] %v403
        %530 = vst [vmem:[%s235 + $0x48] sm:$0xff] %v408
        %531 = vst [vmem:[%s235 + $0x50] sm:$0xff] %v413
        %532 = vst [vmem:[%s235 + $0x58] sm:$0xff] %v418
        %533 = vst [vmem:[%s235 + $0x60] sm:$0xff] %v423
        %534 = vst [vmem:[%s235 + $0x68] sm:$0xff] %v428
        %535 = vst [vmem:[%s235 + $0x70] sm:$0xff] %v433
        %536 = vst [vmem:[%s235 + $0x78] sm:$0xff] %v438
        %537 = vst [vmem:[%s235 + $0x80] sm:$0xff] %v443
        %538 = vst [vmem:[%s235 + $0x88] sm:$0xff] %v448
        %539 = vst [vmem:[%s235 + $0x90] sm:$0xff] %v453
        %540 = vst [vmem:[%s235 + $0x98] sm:$0xff] %v458
        %541 = vst [vmem:[%s235 + $0xa0] sm:$0xff] %v463
        %542 = vst [vmem:[%s235 + $0xa8] sm:$0xff] %v468
        %543 = vst [vmem:[%s235 + $0xb0] sm:$0xff] %v473
        %544 = vst [vmem:[%s235 + $0xb8] sm:$0xff] %v478
        %545 = vst [vmem:[%s235 + $0xc0] sm:$0xff] %v483
        %546 = vst [vmem:[%s235 + $0xc8] sm:$0xff] %v488
        %547 = vst [vmem:[%s235 + $0xd0] sm:$0xff] %v493
        %548 = vst [vmem:[%s235 + $0xd8] sm:$0xff] %v498
        %549 = vst [vmem:[%s235 + $0xe0] sm:$0xff] %v503
        %550 = vst [vmem:[%s235 + $0xe8] sm:$0xff] %v508
        %551 = vst [vmem:[%s235 + $0xf0] sm:$0xff] %v513
        %552 = vst [vmem:[%s235 + $0xf8] sm:$0xff] %v518
        %s553 = sand.u32 %s121, 1
        %s554 = scalar_lea.sflag [#allocation4], %s553
        %s555 = sand.u32 %s121, 1
        %s556 = smul.addr %s555, 256
        %s557 = scalar_lea.vmem [#allocation7], %s556
        // Predicated region
        $region41: #{tpu_custom_call.1} parent=31 // pred_check
          %p558 = pneg %p131
        $region42: #{tpu_custom_call.1} parent=31 // pred_check_branch
          %560 = sbr.rel (%p558) target = $region44
        $region43: #{tpu_custom_call.1} parent=31 // pred_region
          %s561 = smul.u32 32, %s25
          %s563 = ssub.s32 4096, 4096
          %564 = vsyncadd %s554, %s563
          %s565 = sadd.s32 %s26, %s561
          %s566 = smul.addr %s565, 128
          %s567 = scalar_lea.hbm %s3, %s566
          %s568 = sshll.u32 %s557, 4
          %s569 = int_to_ptr.vmem [resolvable:$true] %s568
          %574 = dma.vmem_to_hbm [thread:$0]  %s569, 4096, %s567, %s554, 128, 128, 8
        $region44: #{tpu_custom_call.1} parent=31 // pred_fallthru
          _
      $region32: #{tpu_custom_call.1} parent=5 // pred_fallthru
        _
      %p575 = scmp.le.s32.totalorder 2, %s16
      // Predicated region
      $region45: #{tpu_custom_call.1} parent=5 // pred_check
        %p576 = pneg %p575
      $region46: #{tpu_custom_call.1} parent=5 // pred_check_branch
        %578 = sbr.rel (%p576) target = $region48
      $region47: #{tpu_custom_call.1} parent=5 // pred_region
        %s579 = ssub.s32 %s16, 2
        // Predicated region
        $region49: #{tpu_custom_call.1} parent=47 // pred_check
          %p580 = pneg %p137
        $region50: #{tpu_custom_call.1} parent=47 // pred_check_branch
          %582 = sbr.rel (%p580) target = $region52
        $region51: #{tpu_custom_call.1} parent=47 // pred_region
          %s583 = sand.u32 %s122, 1
          %s584 = scalar_lea.sflag [#allocation4], %s583
          %s585 = sand.u32 %s122, 1
          %s586 = smul.addr %s585, 256
          %s587 = scalar_lea.vmem [#allocation7], %s586
          %588 = dma.done %s584, 4096
        $region52: #{tpu_custom_call.1} parent=47 // pred_fallthru
          _
      $region48: #{tpu_custom_call.1} parent=5 // pred_fallthru
        _
    $region6: #{tpu_custom_call.1} parent=1 // loop_footer
      %s20 = sadd.s32 1, %s16
    $region7: #{tpu_custom_call.1} parent=1 // loop_footer_branch
      %15 = sbr.rel target = $region3
    $region8: #{tpu_custom_call.1} parent=1 // loop_exit
      _
    %589 = vsyncpa [#allocation3], 1
    %s590 = scalar_lea.sflag [#allocation3], 1
    %591 = vsyncpa %s590, 1
    %592 = vsyncpa [#allocation6], 1
    %593 = vsyncpa [#allocation4], 1
    %s594 = scalar_lea.sflag [#allocation4], 1
    %595 = vsyncpa %s594, 1

</llo_original>
